<compile_context>
chip_gen: v5e
topology: v5e:2x2
jax: 0.10.0
libtpu: 0.0.40
codegen_flags: <defaults>
</compile_context>

<pallas_src>
import functools

import jax
import jax.numpy as jnp
from jax.experimental import pallas as pl
from jax.experimental.pallas import tpu as pltpu

_LANES = 128
_HIDDEN = 128
_NEG_BIG = jnp.float32(-1e30)   # effectively -inf after exp(), but inf/nan-safe


def _round_up(n, m):
    return ((n + m - 1) // m) * m


def actor_critic_kernel(
    x_ref,      # (TB, d_in)  bf16, batch tile (un-padded feature dim)
    w1_ref,     # (d_in, 128) bf16
    b1_ref,     # (1, 128)    f32
    w2_ref,     # (128, 128)  bf16
    b2_ref,     # (1, 128)    f32
    wh_ref,     # (128, 128)  bf16  fused heads: [:, :A]=actor, [:, A]=critic, rest 0
    bh_ref,     # (1, 128)    f32
    amask_ref,  # (1, 128)    f32   additive softmax mask: 0 on actor lanes, -1e30 else
    vsel_ref,   # (1, 128)    f32   one-hot selector of the critic value lane
    out_ref,    # (TB, 128)   f32   lanes [0:A]=probs, lane A=value, rest 0
):
    # shared MLP: Linear -> ReLU -> Linear -> ReLU (bf16 MXU matmuls, f32 accum)
    h1 = jnp.dot(x_ref[...], w1_ref[...],
                 preferred_element_type=jnp.float32) + b1_ref[...]
    h1 = jnp.maximum(h1, 0.0)
    h2 = jnp.dot(h1.astype(jnp.bfloat16), w2_ref[...],
                 preferred_element_type=jnp.float32) + b2_ref[...]
    h2 = jnp.maximum(h2, 0.0)

    # fused actor + critic heads: one lane-dense 128-wide matmul
    heads = jnp.dot(h2.astype(jnp.bfloat16), wh_ref[...],
                    preferred_element_type=jnp.float32) + bh_ref[...]

    # numerically-stable softmax over the real A actor lanes only
    logits = heads + amask_ref[...]           # masked lanes pushed to -1e30
    m = jnp.max(logits, axis=-1, keepdims=True)
    e = jnp.exp(logits - m)                   # masked lanes underflow to exactly 0
    denom = jnp.sum(e, axis=-1, keepdims=True)
    probs = e * pl.reciprocal(denom, approx=True)   # EUP slot; VALU stays free

    # critic value sits in lane A (one-hot selector); probs are 0 there already
    out_ref[...] = probs + heads * vsel_ref[...]


def prepare_params(params):
    """One-time (hoisted) weight prep: bf16 matmul operands, fused head, masks."""
    A = params["wa"].shape[1]
    assert A + 1 <= _LANES, "actor outputs + critic value must fit in 128 lanes"

    wh = jnp.zeros((_HIDDEN, _LANES), jnp.float32)
    wh = wh.at[:, :A].set(params["wa"]).at[:, A].set(params["wc"][:, 0])
    bh = jnp.zeros((1, _LANES), jnp.float32)
    bh = bh.at[:, :A].set(params["ba"]).at[:, A].set(params["bc"][:, 0])

    lane = jnp.arange(_LANES)
    amask = jnp.where(lane < A, 0.0, _NEG_BIG).astype(jnp.float32)[None, :]
    vsel = (lane == A).astype(jnp.float32)[None, :]

    return {
        "w1": params["w1"].astype(jnp.bfloat16),
        "b1": params["b1"].astype(jnp.float32),
        "w2": params["w2"].astype(jnp.bfloat16),
        "b2": params["b2"].astype(jnp.float32),
        "wh": wh.astype(jnp.bfloat16),
        "bh": bh,
        "amask": amask,
        "vsel": vsel,
        "num_actions": A,
    }


@functools.partial(jax.jit, static_argnames=("num_actions", "block_b"))
def _actor_critic_jit(x, w1, b1, w2, b2, wh, bh, amask, vsel, *,
                      num_actions, block_b):
    B, d_in = x.shape

    # Even-split batch tiling; force >=2 grid steps once B is large so both
    # v7x TensorCores get work (grid axis is "parallel").
    n_steps = pl.cdiv(B, block_b)
    if n_steps == 1 and B >= 1024:
        n_steps = 2
    tb = _round_up(max(pl.cdiv(B, n_steps), 8), 16)   # 16: bf16 sublane packing
    b_pad = tb * n_steps

    x_bf = x.astype(jnp.bfloat16)
    if b_pad != B:
        x_bf = jnp.zeros((b_pad, d_in), jnp.bfloat16).at[:B, :].set(x_bf)

    # double-buffered x + out tiles, resident weights/masks, with 2x headroom
    vmem_est = (2 * tb * d_in * 2            # x tiles (bf16)
                + 2 * tb * _LANES * 4        # out tiles (f32)
                + (d_in + 2 * _HIDDEN) * _LANES * 2   # resident bf16 weights
                + 6 * _LANES * 4)            # biases + masks (f32)
    vmem_limit = int(min(max(2 * vmem_est, 16 << 20), 64 << 20))

    def _resident(arr):
        nd = arr.ndim
        return pl.BlockSpec(arr.shape, lambda i: (0,) * nd)

    out = pl.pallas_call(
        actor_critic_kernel,
        out_shape=jax.ShapeDtypeStruct((b_pad, _LANES), jnp.float32),
        grid=(n_steps,),
        in_specs=[
            pl.BlockSpec((tb, d_in), lambda i: (i, 0)),   # x: batch-tiled stream
            _resident(w1), _resident(b1),
            _resident(w2), _resident(b2),
            _resident(wh), _resident(bh),
            _resident(amask), _resident(vsel),
        ],
        out_specs=pl.BlockSpec((tb, _LANES), lambda i: (i, 0)),
        compiler_params=pltpu.CompilerParams(
            dimension_semantics=("parallel",),   # megacore / v7x 2-TC sharding
            vmem_limit_bytes=vmem_limit,
        ),
    )(x_bf, w1, b1, w2, b2, wh, bh, amask, vsel)

    # lane-dense slab -> real outputs (slices fuse into consumers under jit)
    probs = out[:B, :num_actions]
    vals = out[:B, num_actions:num_actions + 1]
    return probs, vals


def actor_critic_forward(x, prepped, *, block_b=2048):
    """Full ActorCriticNetwork forward as one batch-tiled Pallas call."""
    return _actor_critic_jit(
        x, prepped["w1"], prepped["b1"], prepped["w2"], prepped["b2"],
        prepped["wh"], prepped["bh"], prepped["amask"], prepped["vsel"],
        num_actions=prepped["num_actions"], block_b=block_b)


def init_params(key, input_dim, output_dim, hidden=_HIDDEN):
    """Deterministic synthetic parameters (PyTorch-like uniform fan-in init)."""
    ks = jax.random.split(key, 8)

    def linear(kw, kb, fan_in, fan_out):
        bound = 1.0 / jnp.sqrt(jnp.float32(fan_in))
        w = jax.random.uniform(kw, (fan_in, fan_out), jnp.float32, -bound, bound)
        b = jax.random.uniform(kb, (1, fan_out), jnp.float32, -bound, bound)
        return w, b

    w1, b1 = linear(ks[0], ks[1], input_dim, hidden)
    w2, b2 = linear(ks[2], ks[3], hidden, hidden)
    wa, ba = linear(ks[4], ks[5], hidden, output_dim)
    wc, bc = linear(ks[6], ks[7], hidden, 1)
    return {"w1": w1, "b1": b1, "w2": w2, "b2": b2,
            "wa": wa, "ba": ba, "wc": wc, "bc": bc}


def reference_forward(x, p):
    h = jnp.maximum(x @ p["w1"] + p["b1"], 0.0)
    h = jnp.maximum(h @ p["w2"] + p["b2"], 0.0)
    logits = h @ p["wa"] + p["ba"]
    probs = jax.nn.softmax(logits, axis=-1)
    vals = h @ p["wc"] + p["bc"]
    return probs, vals


if __name__ == "__main__":
    key = jax.random.PRNGKey(0)
    k_x, k_p = jax.random.split(key)

    batch, input_dim, output_dim = 8, 16, 8
    x = jax.random.normal(k_x, (batch, input_dim), jnp.float32)
    params = init_params(k_p, input_dim, output_dim)
    prepped = prepare_params(params)

    probs, values = actor_critic_forward(x, prepped)
    probs, values = jax.block_until_ready((probs, values))

    # sanity check against a pure-JAX f32 reference
    ref_probs, ref_vals = reference_forward(x, params)
    assert probs.shape == (batch, output_dim)
    assert values.shape == (batch, 1)
    # bf16 matmul operands + EUP approx reciprocal -> loose tolerances vs f32 ref
    assert jnp.allclose(probs, ref_probs, atol=3e-2, rtol=3e-2)
    assert jnp.allclose(values, ref_vals, atol=5e-2, rtol=5e-2)
    assert jnp.allclose(jnp.sum(probs, axis=-1), 1.0, atol=3e-3)

    print("KERNEL_OK")
</pallas_src>

<mosaic_0001>
module attributes {stable_mosaic.version = 11 : i64} {
  func.func @actor_critic_kernel(%arg0: i32, %arg1: memref<16x16xbf16, #tpu.memory_space<vmem>>, %arg2: memref<16x128xbf16, #tpu.memory_space<vmem>>, %arg3: memref<1x128xf32, #tpu.memory_space<vmem>>, %arg4: memref<128x128xbf16, #tpu.memory_space<vmem>>, %arg5: memref<1x128xf32, #tpu.memory_space<vmem>>, %arg6: memref<128x128xbf16, #tpu.memory_space<vmem>>, %arg7: memref<1x128xf32, #tpu.memory_space<vmem>>, %arg8: memref<1x128xf32, #tpu.memory_space<vmem>>, %arg9: memref<1x128xf32, #tpu.memory_space<vmem>>, %arg10: memref<16x128xf32, #tpu.memory_space<vmem>>) attributes {dimension_semantics = [#tpu.dimension_semantics<parallel>], iteration_bounds = array<i64: 1>, scalar_prefetch = 0 : i64, scratch_operands = 0 : i64, tpu.core_type = #tpu.core_type<tc>, window_params = [{transform_indices = @transform_0, window_bounds = array<i64: 16, 16>}, {pipeline_mode = #tpu.pipeline_mode<synchronous>, transform_indices = @transform_1, window_bounds = array<i64: 16, 128>}, {pipeline_mode = #tpu.pipeline_mode<synchronous>, transform_indices = @transform_2, window_bounds = array<i64: 1, 128>}, {pipeline_mode = #tpu.pipeline_mode<synchronous>, transform_indices = @transform_3, window_bounds = array<i64: 128, 128>}, {pipeline_mode = #tpu.pipeline_mode<synchronous>, transform_indices = @transform_4, window_bounds = array<i64: 1, 128>}, {pipeline_mode = #tpu.pipeline_mode<synchronous>, transform_indices = @transform_5, window_bounds = array<i64: 128, 128>}, {pipeline_mode = #tpu.pipeline_mode<synchronous>, transform_indices = @transform_6, window_bounds = array<i64: 1, 128>}, {pipeline_mode = #tpu.pipeline_mode<synchronous>, transform_indices = @transform_7, window_bounds = array<i64: 1, 128>}, {pipeline_mode = #tpu.pipeline_mode<synchronous>, transform_indices = @transform_8, window_bounds = array<i64: 1, 128>}, {transform_indices = @transform_9, window_bounds = array<i64: 16, 128>}]} {
    %c0 = arith.constant 0 : index
    %c0_0 = arith.constant 0 : index
    %0 = vector.load %arg1[%c0, %c0_0] : memref<16x16xbf16, #tpu.memory_space<vmem>>, vector<16x16xbf16>
    %c0_1 = arith.constant 0 : index
    %c0_2 = arith.constant 0 : index
    %1 = vector.load %arg2[%c0_1, %c0_2] : memref<16x128xbf16, #tpu.memory_space<vmem>>, vector<16x128xbf16>
    %cst = arith.constant dense<0.000000e+00> : vector<16x128xf32>
    %2 = tpu.matmul %0, %1, %cst {dimension_numbers = #tpu.dot_dimension_numbers<[1], [0], [0], [1], [0, 0, 1, 1], [], []>} : vector<16x16xbf16>, vector<16x128xbf16>, vector<16x128xf32> -> vector<16x128xf32>
    %c0_3 = arith.constant 0 : index
    %c0_4 = arith.constant 0 : index
    %3 = vector.load %arg3[%c0_3, %c0_4] : memref<1x128xf32, #tpu.memory_space<vmem>>, vector<1x128xf32>
    %4 = vector.broadcast %3 : vector<1x128xf32> to vector<16x128xf32>
    %5 = arith.addf %2, %4 : vector<16x128xf32>
    %cst_5 = arith.constant 0.000000e+00 : f32
    %6 = vector.broadcast %cst_5 : f32 to vector<16x128xf32>
    %7 = arith.maximumf %5, %6 : vector<16x128xf32>
    %8 = arith.truncf %7 : vector<16x128xf32> to vector<16x128xbf16>
    %c0_6 = arith.constant 0 : index
    %c0_7 = arith.constant 0 : index
    %9 = vector.load %arg4[%c0_6, %c0_7] : memref<128x128xbf16, #tpu.memory_space<vmem>>, vector<128x128xbf16>
    %cst_8 = arith.constant dense<0.000000e+00> : vector<16x128xf32>
    %10 = tpu.matmul %8, %9, %cst_8 {dimension_numbers = #tpu.dot_dimension_numbers<[1], [0], [0], [1], [0, 0, 1, 1], [], []>} : vector<16x128xbf16>, vector<128x128xbf16>, vector<16x128xf32> -> vector<16x128xf32>
    %c0_9 = arith.constant 0 : index
    %c0_10 = arith.constant 0 : index
    %11 = vector.load %arg5[%c0_9, %c0_10] : memref<1x128xf32, #tpu.memory_space<vmem>>, vector<1x128xf32>
    %12 = vector.broadcast %11 : vector<1x128xf32> to vector<16x128xf32>
    %13 = arith.addf %10, %12 : vector<16x128xf32>
    %cst_11 = arith.constant 0.000000e+00 : f32
    %14 = vector.broadcast %cst_11 : f32 to vector<16x128xf32>
    %15 = arith.maximumf %13, %14 : vector<16x128xf32>
    %16 = arith.truncf %15 : vector<16x128xf32> to vector<16x128xbf16>
    %c0_12 = arith.constant 0 : index
    %c0_13 = arith.constant 0 : index
    %17 = vector.load %arg6[%c0_12, %c0_13] : memref<128x128xbf16, #tpu.memory_space<vmem>>, vector<128x128xbf16>
    %cst_14 = arith.constant dense<0.000000e+00> : vector<16x128xf32>
    %18 = tpu.matmul %16, %17, %cst_14 {dimension_numbers = #tpu.dot_dimension_numbers<[1], [0], [0], [1], [0, 0, 1, 1], [], []>} : vector<16x128xbf16>, vector<128x128xbf16>, vector<16x128xf32> -> vector<16x128xf32>
    %c0_15 = arith.constant 0 : index
    %c0_16 = arith.constant 0 : index
    %19 = vector.load %arg7[%c0_15, %c0_16] : memref<1x128xf32, #tpu.memory_space<vmem>>, vector<1x128xf32>
    %20 = vector.broadcast %19 : vector<1x128xf32> to vector<16x128xf32>
    %21 = arith.addf %18, %20 : vector<16x128xf32>
    %c0_17 = arith.constant 0 : index
    %c0_18 = arith.constant 0 : index
    %22 = vector.load %arg8[%c0_17, %c0_18] : memref<1x128xf32, #tpu.memory_space<vmem>>, vector<1x128xf32>
    %23 = vector.broadcast %22 : vector<1x128xf32> to vector<16x128xf32>
    %24 = arith.addf %21, %23 : vector<16x128xf32>
    %cst_19 = arith.constant dense<0xFF800000> : vector<16xf32>
    %25 = vector.multi_reduction <maximumf>, %24, %cst_19 [1] : vector<16x128xf32> to vector<16xf32>
    %26 = vector.shape_cast %25 : vector<16xf32> to vector<16x1xf32>
    %27 = vector.broadcast %26 : vector<16x1xf32> to vector<16x128xf32>
    %28 = arith.subf %24, %27 : vector<16x128xf32>
    %29 = math.exp %28 : vector<16x128xf32>
    %cst_20 = arith.constant dense<0.000000e+00> : vector<16xf32>
    %30 = vector.multi_reduction <add>, %29, %cst_20 [1] : vector<16x128xf32> to vector<16xf32>
    %31 = vector.shape_cast %30 : vector<16xf32> to vector<16x1xf32>
    %32 = tpu.reciprocal %31 {approx = true} : vector<16x1xf32> -> vector<16x1xf32>
    %33 = vector.broadcast %32 : vector<16x1xf32> to vector<16x128xf32>
    %34 = arith.mulf %29, %33 : vector<16x128xf32>
    %c0_21 = arith.constant 0 : index
    %c0_22 = arith.constant 0 : index
    %35 = vector.load %arg9[%c0_21, %c0_22] : memref<1x128xf32, #tpu.memory_space<vmem>>, vector<1x128xf32>
    %36 = vector.broadcast %35 : vector<1x128xf32> to vector<16x128xf32>
    %37 = arith.mulf %21, %36 : vector<16x128xf32>
    %38 = arith.addf %34, %37 : vector<16x128xf32>
    %c0_23 = arith.constant 0 : index
    %c0_24 = arith.constant 0 : index
    %39 = vector.load %arg10[%c0_23, %c0_24] : memref<16x128xf32, #tpu.memory_space<vmem>>, vector<16x128xf32>
    tpu.vector_store %arg10[%c0_23, %c0_24], %38 {strides = array<i32>} : memref<16x128xf32, #tpu.memory_space<vmem>>, vector<16x128xf32>,
    return
  }
  func.func @transform_0(%arg0: i32) -> (i32, i32) {
    %c0_i32 = arith.constant 0 : i32
    %c0_i32_0 = arith.constant 0 : i32
    return %arg0, %c0_i32 : i32, i32
  }
  func.func @transform_1(%arg0: i32) -> (i32, i32) {
    %c0_i32 = arith.constant 0 : i32
    %c0_i32_0 = arith.constant 0 : i32
    %c0_i32_1 = arith.constant 0 : i32
    return %c0_i32, %c0_i32_0 : i32, i32
  }
  func.func @transform_2(%arg0: i32) -> (i32, i32) {
    %c0_i32 = arith.constant 0 : i32
    %c0_i32_0 = arith.constant 0 : i32
    %c0_i32_1 = arith.constant 0 : i32
    return %c0_i32, %c0_i32_0 : i32, i32
  }
  func.func @transform_3(%arg0: i32) -> (i32, i32) {
    %c0_i32 = arith.constant 0 : i32
    %c0_i32_0 = arith.constant 0 : i32
    %c0_i32_1 = arith.constant 0 : i32
    return %c0_i32, %c0_i32_0 : i32, i32
  }
  func.func @transform_4(%arg0: i32) -> (i32, i32) {
    %c0_i32 = arith.constant 0 : i32
    %c0_i32_0 = arith.constant 0 : i32
    %c0_i32_1 = arith.constant 0 : i32
    return %c0_i32, %c0_i32_0 : i32, i32
  }
  func.func @transform_5(%arg0: i32) -> (i32, i32) {
    %c0_i32 = arith.constant 0 : i32
    %c0_i32_0 = arith.constant 0 : i32
    %c0_i32_1 = arith.constant 0 : i32
    return %c0_i32, %c0_i32_0 : i32, i32
  }
  func.func @transform_6(%arg0: i32) -> (i32, i32) {
    %c0_i32 = arith.constant 0 : i32
    %c0_i32_0 = arith.constant 0 : i32
    %c0_i32_1 = arith.constant 0 : i32
    return %c0_i32, %c0_i32_0 : i32, i32
  }
  func.func @transform_7(%arg0: i32) -> (i32, i32) {
    %c0_i32 = arith.constant 0 : i32
    %c0_i32_0 = arith.constant 0 : i32
    %c0_i32_1 = arith.constant 0 : i32
    return %c0_i32, %c0_i32_0 : i32, i32
  }
  func.func @transform_8(%arg0: i32) -> (i32, i32) {
    %c0_i32 = arith.constant 0 : i32
    %c0_i32_0 = arith.constant 0 : i32
    %c0_i32_1 = arith.constant 0 : i32
    return %c0_i32, %c0_i32_0 : i32, i32
  }
  func.func @transform_9(%arg0: i32) -> (i32, i32) {
    %c0_i32 = arith.constant 0 : i32
    %c0_i32_0 = arith.constant 0 : i32
    return %arg0, %c0_i32 : i32, i32
  }
}

</mosaic_0001>

<llo_original>
// kernel: _actor_critic_jit.1
$region0: #{_actor_critic_jit.1}
  #allocation0 [shape = 'u32[]', space=smem, size = 0x4, offset = 0x4, fixed_abs, tag = 'smem constant byte address 0x4 - core index']
  #allocation1 [shape = 'u32[72,128]{1,0:T(1,128)}', space=vmem, size = 0x9000, scoped, tag = 'internal scratch']
  %s0 = inlined_call_operand.vmem [shape: bf16[16,16], index: 0, kind: input, shape index: {}]
  %s1 = inlined_call_operand.vmem [shape: bf16[16,128], index: 1, kind: input, shape index: {}]
  %s2 = inlined_call_operand.vmem [shape: f32[1,128], index: 2, kind: input, shape index: {}]
  %s3 = inlined_call_operand.hbm [shape: bf16[128,128], index: 3, kind: input, shape index: {}]
  %s4 = inlined_call_operand.vmem [shape: f32[1,128], index: 4, kind: input, shape index: {}]
  %s5 = inlined_call_operand.hbm [shape: bf16[128,128], index: 5, kind: input, shape index: {}]
  %s6 = inlined_call_operand.vmem [shape: f32[1,128], index: 6, kind: input, shape index: {}]
  %s7 = inlined_call_operand.vmem [shape: f32[1,128], index: 7, kind: input, shape index: {}]
  %s8 = inlined_call_operand.vmem [shape: f32[1,128], index: 8, kind: input, shape index: {}]
  %s9 = inlined_call_operand.vmem [shape: f32[16,128], index: 9, kind: output, shape index: {}]
  %s10 = sld [smem:[#allocation0]]
  $region54: #{_actor_critic_jit.1} parent=0
    _
  %s12 = ssub.s32 1, %s10
  %s13 = scalar_select 0, %s12, %s10
  $region1: #{_actor_critic_jit.1} parent=0
    #allocation2 [shape = 'u8[32768]{0}', space=vmem, size = 0x8000, scoped, tag = 'input window, operand 3, single buffered']
    #allocation3 [shape = 's32[1]{0}', space=sflag, size = 0x4, scoped, tag = 'scoped memory for _actor_critic_jit.1']
    #allocation4 [shape = 'u8[32768]{0}', space=vmem, size = 0x8000, scoped, tag = 'input window, operand 5, single buffered']
    #allocation5 [shape = 's32[1]{0}', space=sflag, size = 0x4, scoped, tag = 'scoped memory for _actor_critic_jit.1']
    %14 = vsyncpa [#allocation3], 0
    %15 = vsyncpa [#allocation5], 0
    // Predicated region
    $region2: #{_actor_critic_jit.1} parent=1 // pred_check
      _
    $region3: #{_actor_critic_jit.1} parent=1 // pred_check_branch
      %17 = sbr.rel (0) target = $region5
    $region4: #{_actor_critic_jit.1} parent=1 // pred_region
      _
    $region5: #{_actor_critic_jit.1} parent=1 // pred_fallthru
      _
    // Predicated region
    $region6: #{_actor_critic_jit.1} parent=1 // pred_check
      _
    $region7: #{_actor_critic_jit.1} parent=1 // pred_check_branch
      %19 = sbr.rel (0) target = $region9
    $region8: #{_actor_critic_jit.1} parent=1 // pred_region
      _
    $region9: #{_actor_critic_jit.1} parent=1 // pred_fallthru
      _
    // Predicated region
    $region10: #{_actor_critic_jit.1} parent=1 // pred_check
      _
    $region11: #{_actor_critic_jit.1} parent=1 // pred_check_branch
      %21 = sbr.rel (0) target = $region13
    $region12: #{_actor_critic_jit.1} parent=1 // pred_region
      _
    $region13: #{_actor_critic_jit.1} parent=1 // pred_fallthru
      _
    // Predicated region
    $region14: #{_actor_critic_jit.1} parent=1 // pred_check
      _
    $region15: #{_actor_critic_jit.1} parent=1 // pred_check_branch
      %23 = sbr.rel (0) target = $region17
    $region16: #{_actor_critic_jit.1} parent=1 // pred_region
      %25 = vsyncadd [#allocation3], 0
      %s26 = sshll.u32 %s3, 4
      %s27 = int_to_ptr.hbm [resolvable:$true] %s26
      %s28 = sshll.u32 [#allocation2], 4
      %s29 = int_to_ptr.vmem [resolvable:$true] %s28
      %34 = dma.hbm_to_vmem [thread:$0]  %s27, 1024, %s29, [#allocation3], 64, 64, 4
    $region17: #{_actor_critic_jit.1} parent=1 // pred_fallthru
      _
    // Predicated region
    $region18: #{_actor_critic_jit.1} parent=1 // pred_check
      _
    $region19: #{_actor_critic_jit.1} parent=1 // pred_check_branch
      %36 = sbr.rel (0) target = $region21
    $region20: #{_actor_critic_jit.1} parent=1 // pred_region
      _
    $region21: #{_actor_critic_jit.1} parent=1 // pred_fallthru
      _
    // Predicated region
    $region22: #{_actor_critic_jit.1} parent=1 // pred_check
      _
    $region23: #{_actor_critic_jit.1} parent=1 // pred_check_branch
      %38 = sbr.rel (0) target = $region25
    $region24: #{_actor_critic_jit.1} parent=1 // pred_region
      %40 = vsyncadd [#allocation5], 0
      %s41 = sshll.u32 %s5, 4
      %s42 = int_to_ptr.hbm [resolvable:$true] %s41
      %s43 = sshll.u32 [#allocation4], 4
      %s44 = int_to_ptr.vmem [resolvable:$true] %s43
      %49 = dma.hbm_to_vmem [thread:$0]  %s42, 1024, %s44, [#allocation5], 64, 64, 4
    $region25: #{_actor_critic_jit.1} parent=1 // pred_fallthru
      _
    // Predicated region
    $region26: #{_actor_critic_jit.1} parent=1 // pred_check
      _
    $region27: #{_actor_critic_jit.1} parent=1 // pred_check_branch
      %51 = sbr.rel (0) target = $region29
    $region28: #{_actor_critic_jit.1} parent=1 // pred_region
      _
    $region29: #{_actor_critic_jit.1} parent=1 // pred_fallthru
      _
    // Predicated region
    $region30: #{_actor_critic_jit.1} parent=1 // pred_check
      _
    $region31: #{_actor_critic_jit.1} parent=1 // pred_check_branch
      %53 = sbr.rel (0) target = $region33
    $region32: #{_actor_critic_jit.1} parent=1 // pred_region
      _
    $region33: #{_actor_critic_jit.1} parent=1 // pred_fallthru
      _
    // Predicated region
    $region34: #{_actor_critic_jit.1} parent=1 // pred_check
      _
    $region35: #{_actor_critic_jit.1} parent=1 // pred_check_branch
      %55 = sbr.rel (0) target = $region37
    $region36: #{_actor_critic_jit.1} parent=1 // pred_region
      _
    $region37: #{_actor_critic_jit.1} parent=1 // pred_fallthru
      _
    // Predicated region
    $region38: #{_actor_critic_jit.1} parent=1 // pred_check
      _
    $region39: #{_actor_critic_jit.1} parent=1 // pred_check_branch
      %57 = sbr.rel (0) target = $region41
    $region40: #{_actor_critic_jit.1} parent=1 // pred_region
      %59 = dma.done [#allocation3], 1024
    $region41: #{_actor_critic_jit.1} parent=1 // pred_fallthru
      _
    // Predicated region
    $region42: #{_actor_critic_jit.1} parent=1 // pred_check
      _
    $region43: #{_actor_critic_jit.1} parent=1 // pred_check_branch
      %61 = sbr.rel (0) target = $region45
    $region44: #{_actor_critic_jit.1} parent=1 // pred_region
      %63 = dma.done [#allocation5], 1024
    $region45: #{_actor_critic_jit.1} parent=1 // pred_fallthru
      _
    %v65 = vld [vmem:[%s0] sm:$0xf]
    %v66 = vld [vmem:[%s0 + $0x4] sm:$0xf]
    %v67 = vld [vmem:[%s1] sm:$0xf]
    %v68 = vld [vmem:[%s1 + $0x4] sm:$0xf]
    %v69 = vld [vmem:[%s2] sm:$0x1]
    %v71 = vperm.slane %v69, 0
    %v75 = vunpack.c.l.b16 %v65
    %v76 = vunpack.c.l.b16 %v66
    %v77 = vpack.c.b16 %v76, %v75
    %v80 = vunpack.c.l.b16 %v67
    %v81 = vunpack.c.l.b16 %v68
    %v82 = vpack.c.b16 %v81, %v80
    %vm84 = vcmask 130048
    %v86 = vsel %vm84, %v77, 0
    %88 = vmatpush.bf16.msra.mxu0 0
    %89 = vmatpush.bf16.msra.mxu0 0
    %90 = vmatpush.bf16.msra.mxu0 0
    %91 = vmatpush.bf16.msra.mxu0 0
    %92 = vmatpush.bf16.msra.mxu0 0
    %93 = vmatpush.bf16.msra.mxu0 0
    %94 = vmatpush.bf16.msra.mxu0 0
    %95 = vmatpush.bf16.msra.mxu0 %v82
    %96 = vmatmul.bf16.gmra.mxu0 %v86
    %v97 = vpop.f32.mrf.mxu0
    %v98 = vadd.f32 %v71, %v97
    %v99 = vpop.f32.mrf.mxu0
    %v100 = vadd.f32 %v71, %v99
    %101 = vdwg.mxu0
    %v102 = vmax.f32 %v98, 0.0
    %v103 = vmax.f32 %v100, 0.0
    %v104 = vpack.c.bf16 %v103, %v102
    %v105 = vld [vmem:[#allocation2] sm:$0xf]
    %v106 = vld [vmem:[#allocation2 + $0x4] sm:$0xf]
    %v107 = vld [vmem:[#allocation2 + $0x8] sm:$0xf]
    %v108 = vld [vmem:[#allocation2 + $0xc] sm:$0xf]
    %v109 = vld [vmem:[#allocation2 + $0x10] sm:$0xf]
    %v110 = vld [vmem:[#allocation2 + $0x14] sm:$0xf]
    %v111 = vld [vmem:[#allocation2 + $0x18] sm:$0xf]
    %v112 = vld [vmem:[#allocation2 + $0x1c] sm:$0xf]
    %v113 = vld [vmem:[#allocation2 + $0x20] sm:$0xf]
    %v114 = vld [vmem:[#allocation2 + $0x24] sm:$0xf]
    %v115 = vld [vmem:[#allocation2 + $0x28] sm:$0xf]
    %v116 = vld [vmem:[#allocation2 + $0x2c] sm:$0xf]
    %v117 = vld [vmem:[#allocation2 + $0x30] sm:$0xf]
    %v118 = vld [vmem:[#allocation2 + $0x34] sm:$0xf]
    %v119 = vld [vmem:[#allocation2 + $0x38] sm:$0xf]
    %v120 = vld [vmem:[#allocation2 + $0x3c] sm:$0xf]
    %v121 = vld [vmem:[%s4] sm:$0x1]
    %v123 = vperm.slane %v121, 0
    %v141 = vunpack.c.l.b16 %v105
    %v142 = vunpack.c.l.b16 %v106
    %v143 = vunpack.c.l.b16 %v107
    %v144 = vunpack.c.l.b16 %v108
    %v145 = vunpack.c.l.b16 %v109
    %v146 = vunpack.c.l.b16 %v110
    %v147 = vunpack.c.l.b16 %v111
    %v148 = vunpack.c.l.b16 %v112
    %v149 = vunpack.c.l.b16 %v113
    %v150 = vunpack.c.l.b16 %v114
    %v151 = vunpack.c.l.b16 %v115
    %v152 = vunpack.c.l.b16 %v116
    %v153 = vunpack.c.l.b16 %v117
    %v154 = vunpack.c.l.b16 %v118
    %v155 = vunpack.c.l.b16 %v119
    %v156 = vunpack.c.l.b16 %v120
    %v157 = vpack.c.b16 %v142, %v141
    %v158 = vpack.c.b16 %v144, %v143
    %v159 = vpack.c.b16 %v146, %v145
    %v160 = vpack.c.b16 %v148, %v147
    %v161 = vpack.c.b16 %v150, %v149
    %v162 = vpack.c.b16 %v152, %v151
    %v163 = vpack.c.b16 %v154, %v153
    %v164 = vpack.c.b16 %v156, %v155
    %173 = vmatpush.bf16.msra.mxu0 %v164
    %174 = vmatpush.bf16.msra.mxu0 %v163
    %175 = vmatpush.bf16.msra.mxu0 %v162
    %176 = vmatpush.bf16.msra.mxu0 %v161
    %177 = vmatpush.bf16.msra.mxu0 %v160
    %178 = vmatpush.bf16.msra.mxu0 %v159
    %179 = vmatpush.bf16.msra.mxu0 %v158
    %180 = vmatpush.bf16.msra.mxu0 %v157
    %181 = vmatmul.bf16.gmra.mxu0 %v104
    %v182 = vpop.f32.mrf.mxu0
    %v183 = vadd.f32 %v123, %v182
    %v184 = vpop.f32.mrf.mxu0
    %v185 = vadd.f32 %v123, %v184
    %186 = vdwg.mxu0
    %v187 = vmax.f32 %v183, 0.0
    %v188 = vmax.f32 %v185, 0.0
    %v189 = vpack.c.bf16 %v188, %v187
    %v190 = vld [vmem:[#allocation4] sm:$0xf]
    %v191 = vld [vmem:[#allocation4 + $0x4] sm:$0xf]
    %v192 = vld [vmem:[#allocation4 + $0x8] sm:$0xf]
    %v193 = vld [vmem:[#allocation4 + $0xc] sm:$0xf]
    %v194 = vld [vmem:[#allocation4 + $0x10] sm:$0xf]
    %v195 = vld [vmem:[#allocation4 + $0x14] sm:$0xf]
    %v196 = vld [vmem:[#allocation4 + $0x18] sm:$0xf]
    %v197 = vld [vmem:[#allocation4 + $0x1c] sm:$0xf]
    %v198 = vld [vmem:[#allocation4 + $0x20] sm:$0xf]
    %v199 = vld [vmem:[#allocation4 + $0x24] sm:$0xf]
    %v200 = vld [vmem:[#allocation4 + $0x28] sm:$0xf]
    %v201 = vld [vmem:[#allocation4 + $0x2c] sm:$0xf]
    %v202 = vld [vmem:[#allocation4 + $0x30] sm:$0xf]
    %v203 = vld [vmem:[#allocation4 + $0x34] sm:$0xf]
    %v204 = vld [vmem:[#allocation4 + $0x38] sm:$0xf]
    %v205 = vld [vmem:[#allocation4 + $0x3c] sm:$0xf]
    %v206 = vld [vmem:[%s6] sm:$0x1]
    %v208 = vperm.slane %v206, 0
    %v226 = vunpack.c.l.b16 %v190
    %v227 = vunpack.c.l.b16 %v191
    %v228 = vunpack.c.l.b16 %v192
    %v229 = vunpack.c.l.b16 %v193
    %v230 = vunpack.c.l.b16 %v194
    %v231 = vunpack.c.l.b16 %v195
    %v232 = vunpack.c.l.b16 %v196
    %v233 = vunpack.c.l.b16 %v197
    %v234 = vunpack.c.l.b16 %v198
    %v235 = vunpack.c.l.b16 %v199
    %v236 = vunpack.c.l.b16 %v200
    %v237 = vunpack.c.l.b16 %v201
    %v238 = vunpack.c.l.b16 %v202
    %v239 = vunpack.c.l.b16 %v203
    %v240 = vunpack.c.l.b16 %v204
    %v241 = vunpack.c.l.b16 %v205
    %v242 = vpack.c.b16 %v227, %v226
    %v243 = vpack.c.b16 %v229, %v228
    %v244 = vpack.c.b16 %v231, %v230
    %v245 = vpack.c.b16 %v233, %v232
    %v246 = vpack.c.b16 %v235, %v234
    %v247 = vpack.c.b16 %v237, %v236
    %v248 = vpack.c.b16 %v239, %v238
    %v249 = vpack.c.b16 %v241, %v240
    %258 = vmatpush.bf16.msra.mxu0 %v249
    %259 = vmatpush.bf16.msra.mxu0 %v248
    %260 = vmatpush.bf16.msra.mxu0 %v247
    %261 = vmatpush.bf16.msra.mxu0 %v246
    %262 = vmatpush.bf16.msra.mxu0 %v245
    %263 = vmatpush.bf16.msra.mxu0 %v244
    %264 = vmatpush.bf16.msra.mxu0 %v243
    %265 = vmatpush.bf16.msra.mxu0 %v242
    %266 = vmatmul.bf16.gmra.mxu0 %v189
    %v267 = vpop.f32.mrf.mxu0
    %v268 = vadd.f32 %v208, %v267
    %v269 = vpop.f32.mrf.mxu0
    %v270 = vadd.f32 %v208, %v269
    %271 = vdwg.mxu0
    %v272 = vld [vmem:[%s7] sm:$0x1]
    %v274 = vperm.slane %v272, 0
    %v276 = vadd.f32 %v268, %v274
    %v277 = vadd.f32 %v270, %v274
    %278 = vmax.xlane.f32.xlu0 %v276
    %v279 = vpop.xlane.xlu0 %278
    %280 = vmax.xlane.f32.xlu0 %v277
    %v281 = vpop.xlane.xlu0 %280
    %v282 = vsub.f32 %v276, %v279
    %v283 = vsub.f32 %v277, %v281
    %v284 = vmul.f32 %v282, 1.442695
    %v285 = vpow.pop %v284
    %v286 = vmul.f32 %v283, 1.442695
    %v287 = vpow.pop %v286
    %288 = vadd.xlane.f32.xlu0 %v285
    %v289 = vpop.xlane.xlu0 %288
    %290 = vadd.xlane.f32.xlu0 %v287
    %v291 = vpop.xlane.xlu0 %290
    %v292 = vrcp.pop %v289
    %v293 = vrcp.pop %v291
    %v294 = vmul.f32 %v285, %v292
    %v295 = vmul.f32 %v287, %v293
    %v296 = vld [vmem:[%s8] sm:$0x1]
    %v298 = vperm.slane %v296, 0
    %v300 = vmul.f32 %v268, %v298
    %v301 = vmul.f32 %v270, %v298
    %v302 = vadd.f32 %v294, %v300
    %v303 = vadd.f32 %v295, %v301
    %304 = vst [vmem:[%s9] sm:$0xff] %v302
    %305 = vst [vmem:[%s9 + $0x8] sm:$0xff] %v303
    // Predicated region
    $region46: #{_actor_critic_jit.1} parent=1 // pred_check
      _
    $region47: #{_actor_critic_jit.1} parent=1 // pred_check_branch
      %307 = sbr.rel (0) target = $region49
    $region48: #{_actor_critic_jit.1} parent=1 // pred_region
      _
    $region49: #{_actor_critic_jit.1} parent=1 // pred_fallthru
      _
    // Predicated region
    $region50: #{_actor_critic_jit.1} parent=1 // pred_check
      _
    $region51: #{_actor_critic_jit.1} parent=1 // pred_check_branch
      %309 = sbr.rel (0) target = $region53
    $region52: #{_actor_critic_jit.1} parent=1 // pred_region
      _
    $region53: #{_actor_critic_jit.1} parent=1 // pred_fallthru
      _
    %310 = vsyncpa [#allocation3], 1
    %311 = vsyncpa [#allocation5], 1

</llo_original>
